<compile_context>
chip_gen: v5e
topology: v5e:2x2
jax: 0.10.0
libtpu: 0.0.40
codegen_flags: <defaults>
</compile_context>

<pallas_src>
import functools

import jax
import jax.numpy as jnp
from jax.experimental import pallas as pl
from jax.experimental.pallas import tpu as pltpu

LANE = 128      # TPU lane width (last dim)
BLOCK_M = 2048  # rows per grid step (1 MiB f32 per input buffer)


def _ce_partial_kernel(ys_ref, tags_ref, out_ref, *, block_m, rows):
    """Per-block partial sum of -ys * log(tags).

    ys_ref   : VMEM tile [block_m, LANE] (input dtype; upcast here)
    tags_ref : VMEM tile [block_m, LANE]
    out_ref  : VMEM tile [8, LANE] f32 -- this block's partial sum
    block_m, rows are static Python ints (baked at trace time).
    """
    ys = ys_ref[...].astype(jnp.float32)
    tags = tags_ref[...].astype(jnp.float32)

    def partial_sum(y, t):
        h = -y * jnp.log(t)
        # Vreg-aligned partial reduce: (block_m,128) -> (block_m//8,8,128) -> (8,128).
        # Pure elementwise vreg adds on the VPU; the single cross-lane reduce of
        # the (8,128) partials happens once, outside the kernel.
        return h.reshape(block_m // 8, 8, LANE).sum(axis=0)

    if rows % block_m == 0:
        # No ragged tail anywhere: single straight-line path.
        out_ref[...] = partial_sum(ys, tags)
    else:
        last = pl.num_programs(0) - 1

        @pl.when(pl.program_id(0) != last)
        def _():
            out_ref[...] = partial_sum(ys, tags)

        @pl.when(pl.program_id(0) == last)
        def _():
            # Last grid block extends past the array; out-of-bounds rows hold
            # unspecified data.  Mask BEFORE the log so garbage can't make NaN:
            # masked lanes become -0 * log(1) = 0.
            base = pl.program_id(0) * block_m
            row_ids = base + jax.lax.broadcasted_iota(
                jnp.int32, (block_m, LANE), 0)
            valid = row_ids < rows
            ys_m = jnp.where(valid, ys, 0.0)
            tags_m = jnp.where(valid, tags, 1.0)
            out_ref[...] = partial_sum(ys_m, tags_m)


@jax.jit
def ce_forward(ys, tags):
    """Pallas TPU implementation of CE.forward: mean(-ys * log(tags))."""
    assert ys.shape == tags.shape
    n = ys.size
    inv_n = 1.0 / n  # static -> compile-time constant multiply

    ys_f = ys.reshape(-1)
    tags_f = tags.reshape(-1)

    # Pad only when unavoidable (N not a multiple of 8*128, needed for the
    # lane-dense reshape).  Pad values are neutral: -0 * log(1) = 0.
    chunk = 8 * LANE
    pad = (-n) % chunk
    if pad:
        ys_f = jnp.pad(ys_f, (0, pad))
        tags_f = jnp.pad(tags_f, (0, pad), constant_values=1)

    rows = ys_f.size // LANE            # always a multiple of 8
    block_m = min(BLOCK_M, rows)        # multiple of 8, fits VMEM everywhere
    num_blocks = pl.cdiv(rows, block_m)

    ys2 = ys_f.reshape(rows, LANE)
    tags2 = tags_f.reshape(rows, LANE)

    kernel = functools.partial(_ce_partial_kernel, block_m=block_m, rows=rows)

    elem_bytes = ys2.dtype.itemsize + tags2.dtype.itemsize
    cost = pl.CostEstimate(
        flops=2 * rows * LANE,                       # mul + add per element
        transcendentals=rows * LANE,                 # one log per element
        bytes_accessed=rows * LANE * elem_bytes + num_blocks * 8 * LANE * 4,
    )

    partials = pl.pallas_call(
        kernel,
        out_shape=jax.ShapeDtypeStruct((num_blocks * 8, LANE), jnp.float32),
        grid_spec=pltpu.PrefetchScalarGridSpec(
            num_scalar_prefetch=0,
            grid=(num_blocks,),
            in_specs=[
                pl.BlockSpec((block_m, LANE), lambda i: (i, 0)),
                pl.BlockSpec((block_m, LANE), lambda i: (i, 0)),
            ],
            out_specs=pl.BlockSpec((8, LANE), lambda i: (i, 0)),
        ),
        compiler_params=pltpu.CompilerParams(
            # Each grid step writes its own output block -> fully parallel
            # (shards across both TensorCores on v7x / megacore).
            dimension_semantics=("parallel",),
        ),
        cost_estimate=cost,
    )(ys2, tags2)

    # Tiny final reduction + mean (constant 1/N) in JAX.
    return jnp.sum(partials) * inv_n


if __name__ == "__main__":
    key = jax.random.PRNGKey(0)
    k_ys, k_tags = jax.random.split(key)

    # Small NCHW-like shapes; tags must be strictly positive for log()
    # (same data contract as the PyTorch reference).
    shape = (2, 4, 16, 16)
    ys = jax.random.uniform(k_ys, shape, dtype=jnp.float32)
    tags = jax.random.uniform(k_tags, shape, dtype=jnp.float32,
                              minval=1e-3, maxval=1.0)

    loss = ce_forward(ys, tags)
    jax.block_until_ready(loss)

    # Cross-check against the pure-JAX reference of the PyTorch forward.
    ref = jnp.mean(-ys * jnp.log(tags))
    assert jnp.allclose(loss, ref, rtol=1e-5, atol=1e-6), (loss, ref)

    print("KERNEL_OK")
</pallas_src>

<mosaic_0001>
module attributes {stable_mosaic.version = 11 : i64} {
  func.func @_ce_partial_kernel(%arg0: i32, %arg1: memref<16x128xf32, #tpu.memory_space<vmem>>, %arg2: memref<16x128xf32, #tpu.memory_space<vmem>>, %arg3: memref<8x128xf32, #tpu.memory_space<vmem>>) attributes {dimension_semantics = [#tpu.dimension_semantics<parallel>], iteration_bounds = array<i64: 1>, scalar_prefetch = 0 : i64, scratch_operands = 0 : i64, tpu.core_type = #tpu.core_type<tc>, window_params = [{transform_indices = @transform_0, window_bounds = array<i64: 16, 128>}, {transform_indices = @transform_1, window_bounds = array<i64: 16, 128>}, {transform_indices = @transform_2, window_bounds = array<i64: 8, 128>}]} {
    %c0 = arith.constant 0 : index
    %c0_0 = arith.constant 0 : index
    %0 = vector.load %arg1[%c0, %c0_0] : memref<16x128xf32, #tpu.memory_space<vmem>>, vector<16x128xf32>
    %c0_1 = arith.constant 0 : index
    %c0_2 = arith.constant 0 : index
    %1 = vector.load %arg2[%c0_1, %c0_2] : memref<16x128xf32, #tpu.memory_space<vmem>>, vector<16x128xf32>
    %cst = arith.constant 0.000000e+00 : f32
    %2 = vector.broadcast %cst : f32 to vector<16x128xf32>
    %3 = arith.subf %2, %0 : vector<16x128xf32>
    %4 = math.log %1 : vector<16x128xf32>
    %5 = arith.mulf %3, %4 : vector<16x128xf32>
    %6 = vector.shape_cast %5 : vector<16x128xf32> to vector<2x8x128xf32>
    %cst_3 = arith.constant dense<0.000000e+00> : vector<8x128xf32>
    %7 = vector.multi_reduction <add>, %6, %cst_3 [0] : vector<2x8x128xf32> to vector<8x128xf32>
    %c0_4 = arith.constant 0 : index
    %c0_5 = arith.constant 0 : index
    %8 = vector.load %arg3[%c0_4, %c0_5] : memref<8x128xf32, #tpu.memory_space<vmem>>, vector<8x128xf32>
    tpu.vector_store %arg3[%c0_4, %c0_5], %7 {strides = array<i32>} : memref<8x128xf32, #tpu.memory_space<vmem>>, vector<8x128xf32>,
    return
  }
  func.func @transform_0(%arg0: i32) -> (i32, i32) {
    %c0_i32 = arith.constant 0 : i32
    %c0_i32_0 = arith.constant 0 : i32
    return %arg0, %c0_i32 : i32, i32
  }
  func.func @transform_1(%arg0: i32) -> (i32, i32) {
    %c0_i32 = arith.constant 0 : i32
    %c0_i32_0 = arith.constant 0 : i32
    return %arg0, %c0_i32 : i32, i32
  }
  func.func @transform_2(%arg0: i32) -> (i32, i32) {
    %c0_i32 = arith.constant 0 : i32
    %c0_i32_0 = arith.constant 0 : i32
    return %arg0, %c0_i32 : i32, i32
  }
}

</mosaic_0001>

<llo_original>
// kernel: ce_forward.1
$region0: #{ce_forward.1}
  #allocation0 [shape = 'u32[]', space=smem, size = 0x4, offset = 0x4, fixed_abs, tag = 'smem constant byte address 0x4 - core index']
  #allocation1 [shape = 'u32[72,128]{1,0:T(1,128)}', space=vmem, size = 0x9000, scoped, tag = 'internal scratch']
  %s0 = inlined_call_operand.vmem [shape: f32[16,128], index: 0, kind: input, shape index: {}]
  %s1 = inlined_call_operand.vmem [shape: f32[16,128], index: 1, kind: input, shape index: {}]
  %s2 = inlined_call_operand.vmem [shape: f32[8,128], index: 2, kind: output, shape index: {}]
  %s3 = sld [smem:[#allocation0]]
  $region18: #{ce_forward.1} parent=0
    _
  %s5 = ssub.s32 1, %s3
  %s6 = scalar_select 0, %s5, %s3
  // Predicated region
  $region2: #{ce_forward.1} parent=0 // pred_check
    _
  $region3: #{ce_forward.1} parent=0 // pred_check_branch
    %8 = sbr.rel (0) target = $region5
  $region4: #{ce_forward.1} parent=0 // pred_region
    _
  $region5: #{ce_forward.1} parent=0 // pred_fallthru
    _
  // Predicated region
  $region6: #{ce_forward.1} parent=0 // pred_check
    _
  $region7: #{ce_forward.1} parent=0 // pred_check_branch
    %10 = sbr.rel (0) target = $region9
  $region8: #{ce_forward.1} parent=0 // pred_region
    _
  $region9: #{ce_forward.1} parent=0 // pred_fallthru
    _
  %v11 = vld [vmem:[%s0] sm:$0xff]
  %v12 = vld [vmem:[%s0 + $0x8] sm:$0xff]
  %v13 = vld [vmem:[%s1] sm:$0xff]
  %v14 = vld [vmem:[%s1 + $0x8] sm:$0xff]
  %v15 = vsub.f32 0.0, %v11
  %v16 = vsub.f32 0.0, %v12
  %v17 = vlog2.pop %v13
  %v18 = vmul.f32 %v17, 0.6931472
  %v19 = vlog2.pop %v14
  %v20 = vmul.f32 %v19, 0.6931472
  %v21 = vmul.f32 %v15, %v18
  %v22 = vmul.f32 %v16, %v20
  %v23 = vadd.f32 %v21, %v22
  %24 = vst [vmem:[%s2] sm:$0xff] %v23
  // Predicated region
  $region10: #{ce_forward.1} parent=0 // pred_check
    _
  $region11: #{ce_forward.1} parent=0 // pred_check_branch
    %26 = sbr.rel (0) target = $region13
  $region12: #{ce_forward.1} parent=0 // pred_region
    _
  $region13: #{ce_forward.1} parent=0 // pred_fallthru
    _
  // Predicated region
  $region14: #{ce_forward.1} parent=0 // pred_check
    _
  $region15: #{ce_forward.1} parent=0 // pred_check_branch
    %28 = sbr.rel (0) target = $region17
  $region16: #{ce_forward.1} parent=0 // pred_region
    _
  $region17: #{ce_forward.1} parent=0 // pred_fallthru
    _

</llo_original>
